<compile_context>
chip_gen: v5e
topology: v5e:2x2
jax: 0.10.0
libtpu: 0.0.40
codegen_flags: <defaults>
</compile_context>

<pallas_src>
import functools
import math

import jax
import jax.numpy as jnp
from jax.experimental import pallas as pl
from jax.experimental.pallas import tpu as pltpu


_TINY_INPUT_BYTES = 256 << 10   # below this, the fused XLA add beats a kernel launch


def make_pe_table(d_model: int, max_len: int, dtype=jnp.float32) -> jnp.ndarray:
    """Deterministic buffer setup (matches the PyTorch __init__ exactly)."""
    position = jnp.arange(0, max_len, dtype=jnp.float32)[:, None]            # (max_len, 1)
    div_term = jnp.exp(
        jnp.arange(0, d_model, 2, dtype=jnp.float32)
        * (-(math.log(10000.0) / d_model))
    )                                                                        # (ceil(d/2),)
    pe = jnp.zeros((max_len, d_model), dtype=jnp.float32)
    pe = pe.at[:, 0::2].set(jnp.sin(position * div_term))
    if d_model % 2 == 0:
        pe = pe.at[:, 1::2].set(jnp.cos(position * div_term))
    else:
        pe = pe.at[:, 1::2].set(jnp.cos(position * div_term[:-1]))
    return pe.astype(dtype)                                                  # (max_len, d_model)


def _pe_add_kernel(x_ref, pe_ref, o_ref):
    # x_ref / pe_ref / o_ref are all (t_rows, cols): one load, one add, one store.
    # Explicit cast so a mixed-dtype call never relies on implicit narrowing.
    o_ref[...] = (x_ref[...] + pe_ref[...]).astype(o_ref.dtype)


@functools.lru_cache(maxsize=None)
def _target_block_bytes() -> int:
    """Generation-aware x/out block size for this DMA-bound add."""
    try:
        kind = jax.devices()[0].device_kind.lower()
    except Exception:  # no devices visible at trace time — fall back conservatively
        kind = ""
    if ("v5 lite" in kind) or ("v5e" in kind) or ("v5litepod" in kind):
        target = 2 << 20   # v5e: ~0.82 TB/s HBM, 16 MiB default scoped VMEM
    else:
        target = 4 << 20   # v6e / v7x (and unknown/newer): 1.4–3.2 TB/s HBM
    # Never let the ~6×block pipelined footprint approach physical VMEM
    # (v7x has only 64 MiB per TensorCore vs 128 MiB on v5e/v6e).
    try:
        vmem = int(pltpu.get_tpu_info().vmem_capacity_bytes)
    except Exception:
        vmem = 64 << 20    # conservative: v7x per-TC capacity
    return int(min(target, max(1 << 20, vmem // 16)))


def _choose_row_tile(rows: int, cols: int, itemsize: int, block_bytes: int) -> int:
    """Largest row tile (aligned to the dtype's packed-sublane multiple) ≈ block_bytes."""
    mult = max(8, 32 // max(1, itemsize))   # 8 for f32, 16 for bf16/f16, 32 for i8/fp8
    r = max(1, block_bytes // max(1, cols * itemsize))
    if r >= rows:
        return rows
    return max(mult, (r // mult) * mult)


def _build_call(B, rows, cols, t_rows, dtype, vmem_limit, pe_single_buffer, donate_x):
    pe_spec_kwargs = {}
    if pe_single_buffer:
        # pe's block index only changes once every B grid steps; one buffer is enough
        # and frees VMEM for larger x/out tiles.
        pe_spec_kwargs["pipeline_mode"] = pl.Buffered(1)
    n_tiles = pl.cdiv(rows, t_rows)
    return pl.pallas_call(
        _pe_add_kernel,
        out_shape=jax.ShapeDtypeStruct((B, rows, cols), dtype),
        grid_spec=pltpu.PrefetchScalarGridSpec(
            num_scalar_prefetch=0,
            # B innermost (fastest-varying) → pe block index unchanged for B consecutive
            # steps, so Pallas skips re-fetching it.
            grid=(n_tiles, B),
            in_specs=[
                pl.BlockSpec((pl.Squeezed(), t_rows, cols), lambda s, b: (b, s, 0)),
                pl.BlockSpec((t_rows, cols), lambda s, b: (s, 0), **pe_spec_kwargs),
            ],
            out_specs=pl.BlockSpec((pl.Squeezed(), t_rows, cols),
                                   lambda s, b: (b, s, 0)),
        ),
        compiler_params=pltpu.CompilerParams(
            # Every (s, b) output block is independent — no reduction axis — so both
            # axes are parallel: lets v7x megacore shard over batch too.
            dimension_semantics=("parallel", "parallel"),
            vmem_limit_bytes=vmem_limit,
        ),
        input_output_aliases=({0: 0} if donate_x else {}),
    )


def _pe_add_call(x3: jnp.ndarray, pe2: jnp.ndarray, t_rows: int, rows: int,
                 cols: int, donate_x: bool) -> jnp.ndarray:
    """x3: (B, rows, cols); pe2: (>=rows, cols). Returns x3 + pe2[:rows] per batch."""
    B = x3.shape[0]
    itemsize = jnp.dtype(x3.dtype).itemsize
    block_bytes = t_rows * cols * itemsize
    # Footprint: x (2 bufs) + out (2 bufs) + pe (1–2 bufs) ≈ 6×block, plus headroom.
    vmem_limit = int(min(64 << 20, max(16 << 20, 6 * block_bytes + (2 << 20))))
    try:
        return _build_call(B, rows, cols, t_rows, x3.dtype, vmem_limit,
                           pe_single_buffer=True, donate_x=donate_x)(x3, pe2)
    except Exception:
        # Fallback if this JAX build rejects Buffered(1): default double-buffered pe.
        return _build_call(B, rows, cols, t_rows, x3.dtype, vmem_limit,
                           pe_single_buffer=False, donate_x=donate_x)(x3, pe2)


def positional_encoding_forward(x: jnp.ndarray, pe: jnp.ndarray, *,
                                force_pallas: bool = False,
                                donate_x: bool = False) -> jnp.ndarray:
    """x: (B, S, D); pe: (max_len, D). Returns x + pe[:S] broadcast over batch."""
    B, S, D = x.shape
    max_len, d_model = pe.shape
    if D != d_model:
        raise ValueError(f"d_model mismatch: x has {D}, pe table has {d_model}")
    if S > max_len:
        raise ValueError(f"sequence length {S} exceeds max_len {max_len}")

    if pe.dtype != x.dtype:
        # Keep the whole stream in one dtype (halves pe bytes for bf16 x). If bit-exact
        # parity with the torch f32-buffer promotion matters, skip this cast: the kernel
        # add promotes and the store casts to the output dtype.
        pe = pe.astype(x.dtype)

    itemsize = jnp.dtype(x.dtype).itemsize
    if (not force_pallas) and (B * S * D * itemsize) < _TINY_INPUT_BYTES:
        # Kernel launch + grid bookkeeping dwarf the data movement here.
        return x + pe[None, :S, :]

    block_bytes = _target_block_bytes()

    if D % 128 != 0 and (S * D) % 128 == 0:
        # Lane-dense path: fold (S, D) -> (S*D/128, 128) so the output's last dim is a
        # full 128-lane vreg width (unmasked stores). Row-major reshape preserves the
        # per-(batch, position) pairing with pe, so the add is identical elementwise.
        rows, cols = (S * D) // 128, 128
        x_v = x.reshape(B, rows, cols)
        pe_v = pe[:S, :].reshape(rows, cols)  # small S*D copy; buys dense stores
        t_rows = _choose_row_tile(rows, cols, itemsize, block_bytes)
        out = _pe_add_call(x_v, pe_v, t_rows, rows, cols, donate_x)
        return out.reshape(B, S, D)

    # Generic / lane-aligned path: keep (S, D) and window the pe table in place via the
    # BlockSpec index_map — no wrapper-side pe[:S] copy.
    rows, cols = S, D
    t_rows = _choose_row_tile(rows, cols, itemsize, block_bytes)
    pe_v = pe
    if t_rows == S and (S % 8 != 0) and (S != max_len):
        # Corner case: a single full-S block whose row count is neither a multiple of 8
        # nor pe's full leading dim — slice pe so the block equals its full extent.
        pe_v = pe[:S, :]
    return _pe_add_call(x, pe_v, t_rows, rows, cols, donate_x)


if __name__ == "__main__":
    key = jax.random.PRNGKey(0)

    # --- Demo shape from the module spec (tiny): default path short-circuits to XLA. ---
    d_model, max_len, batch, seq = 32, 16, 2, 8
    kx, key = jax.random.split(key)
    x = jax.random.normal(kx, (batch, seq, d_model), dtype=jnp.float32)
    pe = make_pe_table(d_model, max_len, dtype=x.dtype)
    ref = x + pe[None, :seq, :]

    out = jax.block_until_ready(positional_encoding_forward(x, pe))
    assert out.shape == x.shape
    assert jnp.allclose(out, ref, atol=1e-6), "mismatch vs reference (tiny/XLA path)"

    # --- Same tiny shape forced through the Pallas lane-dense path (D % 128 != 0). ---
    out_p = jax.block_until_ready(
        positional_encoding_forward(x, pe, force_pallas=True))
    assert out_p.shape == x.shape
    assert jnp.allclose(out_p, ref, atol=1e-6), "mismatch vs reference (lane-dense path)"

    # --- D % 128 == 0 exercises the windowed-pe Pallas path. ---
    d_model2, max_len2, batch2, seq2 = 128, 16, 2, 8
    kx2, key = jax.random.split(key)
    x2 = jax.random.normal(kx2, (batch2, seq2, d_model2), dtype=jnp.float32)
    pe2 = make_pe_table(d_model2, max_len2, dtype=x2.dtype)
    out2 = jax.block_until_ready(
        positional_encoding_forward(x2, pe2, force_pallas=True))
    ref2 = x2 + pe2[None, :seq2, :]
    assert out2.shape == x2.shape
    assert jnp.allclose(out2, ref2, atol=1e-6), "mismatch vs reference (windowed path)"

    print("KERNEL_OK")
</pallas_src>

<mosaic_0001>
module attributes {stable_mosaic.version = 11 : i64} {
  func.func @_pe_add_kernel(%arg0: i32, %arg1: i32, %arg2: memref<1x2x128xf32, #tpu.memory_space<vmem>>, %arg3: memref<2x128xf32, #tpu.memory_space<vmem>>, %arg4: memref<1x2x128xf32, #tpu.memory_space<vmem>>) attributes {dimension_semantics = [#tpu.dimension_semantics<parallel>, #tpu.dimension_semantics<parallel>], iteration_bounds = array<i64: 1, 2>, scalar_prefetch = 0 : i64, scratch_operands = 0 : i64, tpu.core_type = #tpu.core_type<tc>, window_params = [{transform_indices = @transform_0, window_bounds = array<i64: 1, 2, 128>}, {pipeline_mode = #tpu.pipeline_mode<synchronous>, transform_indices = @transform_1, window_bounds = array<i64: 2, 128>}, {transform_indices = @transform_2, window_bounds = array<i64: 1, 2, 128>}]} {
    %c0 = arith.constant 0 : index
    %c0_0 = arith.constant 0 : index
    %c0_1 = arith.constant 0 : index
    %0 = vector.load %arg2[%c0, %c0_0, %c0_1] : memref<1x2x128xf32, #tpu.memory_space<vmem>>, vector<1x2x128xf32>
    %1 = vector.shape_cast %0 : vector<1x2x128xf32> to vector<2x128xf32>
    %c0_2 = arith.constant 0 : index
    %c0_3 = arith.constant 0 : index
    %2 = vector.load %arg3[%c0_2, %c0_3] : memref<2x128xf32, #tpu.memory_space<vmem>>, vector<2x128xf32>
    %3 = arith.addf %1, %2 : vector<2x128xf32>
    %c0_4 = arith.constant 0 : index
    %c0_5 = arith.constant 0 : index
    %c0_6 = arith.constant 0 : index
    %4 = vector.load %arg4[%c0_4, %c0_5, %c0_6] : memref<1x2x128xf32, #tpu.memory_space<vmem>>, vector<1x2x128xf32>
    %5 = vector.shape_cast %4 : vector<1x2x128xf32> to vector<2x128xf32>
    %6 = vector.shape_cast %3 : vector<2x128xf32> to vector<1x2x128xf32>
    tpu.vector_store %arg4[%c0_4, %c0_5, %c0_6], %6 {strides = array<i32>} : memref<1x2x128xf32, #tpu.memory_space<vmem>>, vector<1x2x128xf32>,
    return
  }
  func.func @transform_0(%arg0: i32, %arg1: i32) -> (i32, i32, i32) {
    %c0_i32 = arith.constant 0 : i32
    %c0_i32_0 = arith.constant 0 : i32
    return %arg1, %arg0, %c0_i32 : i32, i32, i32
  }
  func.func @transform_1(%arg0: i32, %arg1: i32) -> (i32, i32) {
    %c0_i32 = arith.constant 0 : i32
    %c0_i32_0 = arith.constant 0 : i32
    return %arg0, %c0_i32 : i32, i32
  }
  func.func @transform_2(%arg0: i32, %arg1: i32) -> (i32, i32, i32) {
    %c0_i32 = arith.constant 0 : i32
    %c0_i32_0 = arith.constant 0 : i32
    return %arg1, %arg0, %c0_i32 : i32, i32, i32
  }
}

module attributes {stable_mosaic.version = 11 : i64} {
  func.func @_pe_add_kernel(%arg0: i32, %arg1: i32, %arg2: memref<1x2x128xf32, #tpu.memory_space<vmem>>, %arg3: memref<2x128xf32, #tpu.memory_space<vmem>>, %arg4: memref<1x2x128xf32, #tpu.memory_space<vmem>>) attributes {dimension_semantics = [#tpu.dimension_semantics<parallel>, #tpu.dimension_semantics<parallel>], iteration_bounds = array<i64: 1, 2>, scalar_prefetch = 0 : i64, scratch_operands = 0 : i64, tpu.core_type = #tpu.core_type<tc>, window_params = [{transform_indices = @transform_0, window_bounds = array<i64: 1, 2, 128>}, {transform_indices = @transform_1, window_bounds = array<i64: 2, 128>}, {transform_indices = @transform_2, window_bounds = array<i64: 1, 2, 128>}]} {
    %c0 = arith.constant 0 : index
    %c0_0 = arith.constant 0 : index
    %c0_1 = arith.constant 0 : index
    %0 = vector.load %arg2[%c0, %c0_0, %c0_1] : memref<1x2x128xf32, #tpu.memory_space<vmem>>, vector<1x2x128xf32>
    %1 = vector.shape_cast %0 : vector<1x2x128xf32> to vector<2x128xf32>
    %c0_2 = arith.constant 0 : index
    %c0_3 = arith.constant 0 : index
    %2 = vector.load %arg3[%c0_2, %c0_3] : memref<2x128xf32, #tpu.memory_space<vmem>>, vector<2x128xf32>
    %3 = arith.addf %1, %2 : vector<2x128xf32>
    %c0_4 = arith.constant 0 : index
    %c0_5 = arith.constant 0 : index
    %c0_6 = arith.constant 0 : index
    %4 = vector.load %arg4[%c0_4, %c0_5, %c0_6] : memref<1x2x128xf32, #tpu.memory_space<vmem>>, vector<1x2x128xf32>
    %5 = vector.shape_cast %4 : vector<1x2x128xf32> to vector<2x128xf32>
    %6 = vector.shape_cast %3 : vector<2x128xf32> to vector<1x2x128xf32>
    tpu.vector_store %arg4[%c0_4, %c0_5, %c0_6], %6 {strides = array<i32>} : memref<1x2x128xf32, #tpu.memory_space<vmem>>, vector<1x2x128xf32>,
    return
  }
  func.func @transform_0(%arg0: i32, %arg1: i32) -> (i32, i32, i32) {
    %c0_i32 = arith.constant 0 : i32
    %c0_i32_0 = arith.constant 0 : i32
    return %arg1, %arg0, %c0_i32 : i32, i32, i32
  }
  func.func @transform_1(%arg0: i32, %arg1: i32) -> (i32, i32) {
    %c0_i32 = arith.constant 0 : i32
    %c0_i32_0 = arith.constant 0 : i32
    return %arg0, %c0_i32 : i32, i32
  }
  func.func @transform_2(%arg0: i32, %arg1: i32) -> (i32, i32, i32) {
    %c0_i32 = arith.constant 0 : i32
    %c0_i32_0 = arith.constant 0 : i32
    return %arg1, %arg0, %c0_i32 : i32, i32, i32
  }
}

</mosaic_0001>

<llo_original>
// kernel: tpu_custom_call.1
$region0: #{tpu_custom_call.1}
  #allocation0 [shape = 'u32[]', space=smem, size = 0x4, offset = 0x4, fixed_abs, tag = 'smem constant byte address 0x4 - core index']
  #allocation1 [shape = 'u32[72,128]{1,0:T(1,128)}', space=vmem, size = 0x9000, scoped, tag = 'internal scratch']
  %s0 = inlined_call_operand.hbm [shape: f32[2,2,128], index: 0, kind: input, shape index: {}]
  %s1 = inlined_call_operand.hbm [shape: f32[2,128], index: 1, kind: input, shape index: {}]
  %s2 = inlined_call_operand.hbm [shape: f32[2,2,128], index: 2, kind: output, shape index: {}]
  %s3 = sld [smem:[#allocation0]]
  $region49: #{tpu_custom_call.1} parent=0
    _
  %s5 = ssub.s32 1, %s3
  %s6 = scalar_select 0, %s5, %s3
  $region1: #{tpu_custom_call.1} parent=0
    #allocation2 [shape = 'u8[2048]{0}', space=vmem, size = 0x800, scoped, tag = 'input window, operand 0']
    #allocation3 [shape = 's32[2]{0}', space=sflag, size = 0x8, scoped, tag = 'scoped memory for tpu_custom_call.1']
    #allocation4 [shape = 's32[2]{0}', space=sflag, size = 0x8, scoped, tag = 'scoped memory for tpu_custom_call.1']
    #allocation5 [shape = 'u8[1024]{0}', space=vmem, size = 0x400, scoped, tag = 'input window, operand 1, single buffered']
    #allocation6 [shape = 's32[1]{0}', space=sflag, size = 0x4, scoped, tag = 'scoped memory for tpu_custom_call.1']
    #allocation7 [shape = 'u8[2048]{0}', space=vmem, size = 0x800, scoped, tag = 'output window, operand 0']
    %7 = vsyncpa [#allocation3], 0
    %s8 = scalar_lea.sflag [#allocation3], 1
    %9 = vsyncpa %s8, 0
    %10 = vsyncpa [#allocation6], 0
    %11 = vsyncpa [#allocation4], 0
    %s12 = scalar_lea.sflag [#allocation4], 1
    %13 = vsyncpa %s12, 0
    loop: start=0, step=1, limit=4
    $region2: #{tpu_custom_call.1} parent=1 // loop_pre_header
      _
    $region3: #{tpu_custom_call.1} parent=1 // loop_header
      %s15 = sphi 0, %s19
      %p16 = scmp.ge.s32.totalorder %s15, 4
      %s22 = sphi 0, %s34
      %s23 = sphi 0, %s30
      %s24 = sphi 0, %s22
      %s25 = sphi 0, %s23
      %s26 = sphi 0, %s24
      %s27 = sphi 0, %s25
      %s39 = sphi 0, %s41
      %s42 = sphi 0, %s39
      %s43 = sphi 0, %s42
      %s59 = sphi 0, %s43
      %s65 = sphi 0, %s67
      %s68 = sphi 0, %s65
      %s69 = sphi 0, %s68
      %s85 = sphi 0, %s69
      %s93 = sphi 0, %s95
      %s96 = sphi 0, %s93
      %s97 = sphi 0, %s96
      %s113 = sphi 0, %s97
    $region4: #{tpu_custom_call.1} parent=1 // loop_header_branch
      %18 = sbr.rel (%p16) target = $region8
    $region5: #{tpu_custom_call.1} parent=1 // loop_body
      %s20 = ssub.s32 %s15, 1
      %s21 = ssub.s32 %s15, 2
      %s28 = sadd.s32 1, %s23
      %p29 = scmp.ge.s32.totalorder %s28, 2
      %s30 = scalar_select %p29, 0, %s28
      %s31 = sadd.s32 1, %s22
      %s32 = scalar_select %p29, %s31, %s22
      %p33 = scmp.ge.s32.totalorder %s32, 1
      %s34 = scalar_select %p33, 0, %s32
      %s35 = ssub.s32 %s23, %s30
      %s36 = ssub.s32 %s22, %s34
      %s37 = sor.u32 %s35, %s36
      %p38 = scmp.eq.s32.totalorder %s37, 0
      %s40 = sadd.s32 %s39, 1
      %s41 = scalar_select %p38, %s39, %s40
      %p44 = pneg %p38
      %p45 = scmp.eq.s32.totalorder %s15, 1
      %p46 = por %p44, %p45
      %p47 = scmp.ne.s32.totalorder %s39, %s42
      %p48 = scmp.eq.s32.totalorder %s15, 0
      %p49 = por %p47, %p48
      %p50 = scmp.ne.s32.totalorder %s39, %s42
      %p51 = scmp.eq.s32.totalorder %s20, 1
      %p52 = por %p50, %p51
      %p53 = scmp.ne.s32.totalorder %s42, %s43
      %p54 = scmp.eq.s32.totalorder %s20, 0
      %p55 = por %p53, %p54
      %p56 = scmp.ne.s32.totalorder %s42, %s43
      %p57 = scmp.eq.s32.totalorder %s21, 1
      %p58 = por %p56, %p57
      %p60 = scmp.ne.s32.totalorder %s43, %s59
      %p61 = scmp.eq.s32.totalorder %s21, 0
      %p62 = por %p60, %p61
      %s63 = ssub.s32 %s22, %s34
      %p64 = scmp.eq.s32.totalorder %s63, 0
      %s66 = sadd.s32 %s65, 1
      %s67 = scalar_select %p64, %s65, %s66
      %p70 = pneg %p64
      %p71 = scmp.eq.s32.totalorder %s15, 1
      %p72 = por %p70, %p71
      %p73 = scmp.ne.s32.totalorder %s65, %s68
      %p74 = scmp.eq.s32.totalorder %s15, 0
      %p75 = por %p73, %p74
      %p76 = scmp.ne.s32.totalorder %s65, %s68
      %p77 = scmp.eq.s32.totalorder %s20, 1
      %p78 = por %p76, %p77
      %p79 = scmp.ne.s32.totalorder %s68, %s69
      %p80 = scmp.eq.s32.totalorder %s20, 0
      %p81 = por %p79, %p80
      %p82 = scmp.ne.s32.totalorder %s68, %s69
      %p83 = scmp.eq.s32.totalorder %s21, 1
      %p84 = por %p82, %p83
      %p86 = scmp.ne.s32.totalorder %s69, %s85
      %p87 = scmp.eq.s32.totalorder %s21, 0
      %p88 = por %p86, %p87
      %s89 = ssub.s32 %s23, %s30
      %s90 = ssub.s32 %s22, %s34
      %s91 = sor.u32 %s89, %s90
      %p92 = scmp.eq.s32.totalorder %s91, 0
      %s94 = sadd.s32 %s93, 1
      %s95 = scalar_select %p92, %s93, %s94
      %p98 = pneg %p92
      %p99 = scmp.eq.s32.totalorder %s15, 1
      %p100 = por %p98, %p99
      %p101 = scmp.ne.s32.totalorder %s93, %s96
      %p102 = scmp.eq.s32.totalorder %s15, 0
      %p103 = por %p101, %p102
      %p104 = scmp.ne.s32.totalorder %s93, %s96
      %p105 = scmp.eq.s32.totalorder %s20, 1
      %p106 = por %p104, %p105
      %p107 = scmp.ne.s32.totalorder %s96, %s97
      %p108 = scmp.eq.s32.totalorder %s20, 0
      %p109 = por %p107, %p108
      %p110 = scmp.ne.s32.totalorder %s96, %s97
      %p111 = scmp.eq.s32.totalorder %s21, 1
      %p112 = por %p110, %p111
      %p114 = scmp.ne.s32.totalorder %s97, %s113
      %p115 = scmp.eq.s32.totalorder %s21, 0
      %p116 = por %p114, %p115
      %p117 = scmp.le.s32.totalorder 1, %s15
      %p118 = scmp.lt.s32.totalorder %s15, 3
      %p119 = pnand %p117, %p118
      %p120 = pneg %p119
      // Predicated region
      $region9: #{tpu_custom_call.1} parent=5 // pred_check
        _
      $region10: #{tpu_custom_call.1} parent=5 // pred_check_branch
        %122 = sbr.rel (%p119) target = $region12
      $region11: #{tpu_custom_call.1} parent=5 // pred_region
        %s123 = ssub.s32 %s15, 1
        // Predicated region
        $region13: #{tpu_custom_call.1} parent=11 // pred_check
          %p124 = pneg %p81
        $region14: #{tpu_custom_call.1} parent=11 // pred_check_branch
          %126 = sbr.rel (%p124) target = $region16
        $region15: #{tpu_custom_call.1} parent=11 // pred_region
          %128 = vsyncadd [#allocation6], 0
          %s129 = smul.addr %s24, 2
          %s130 = scalar_lea.hbm %s1, %s129
          %s132 = sshll.u32 %s130, 4
          %s133 = int_to_ptr.hbm [resolvable:$true] %s132
          %s134 = sshll.u32 [#allocation5], 4
          %s135 = int_to_ptr.vmem [resolvable:$true] %s134
          %137 = dma.hbm_to_vmem [thread:$0]  %s133, 32, %s135, [#allocation6]
        $region16: #{tpu_custom_call.1} parent=11 // pred_fallthru
          _
      $region12: #{tpu_custom_call.1} parent=5 // pred_fallthru
        _
      %p138 = scmp.lt.s32.totalorder %s15, 2
      // Predicated region
      $region17: #{tpu_custom_call.1} parent=5 // pred_check
        %p139 = pneg %p138
      $region18: #{tpu_custom_call.1} parent=5 // pred_check_branch
        %141 = sbr.rel (%p139) target = $region20
      $region19: #{tpu_custom_call.1} parent=5 // pred_region
        // Predicated region
        $region21: #{tpu_custom_call.1} parent=19 // pred_check
          %p142 = pneg %p49
        $region22: #{tpu_custom_call.1} parent=19 // pred_check_branch
          %144 = sbr.rel (%p142) target = $region24
        $region23: #{tpu_custom_call.1} parent=19 // pred_region
          %s145 = sand.u32 %s39, 1
          %s146 = scalar_lea.sflag [#allocation3], %s145
          %s147 = sand.u32 %s39, 1
          %s148 = smul.addr %s147, 2
          %s149 = scalar_lea.vmem [#allocation2], %s148
          %151 = vsyncadd %s146, 0
          %s152 = sadd.s32 %s22, %s23
          %s153 = smul.addr %s152, 2
          %s154 = scalar_lea.hbm %s0, %s153
          %s156 = sshll.u32 %s154, 4
          %s157 = int_to_ptr.hbm [resolvable:$true] %s156
          %s158 = sshll.u32 %s149, 4
          %s159 = int_to_ptr.vmem [resolvable:$true] %s158
          %161 = dma.hbm_to_vmem [thread:$0]  %s157, 32, %s159, %s146
        $region24: #{tpu_custom_call.1} parent=19 // pred_fallthru
          _
      $region20: #{tpu_custom_call.1} parent=5 // pred_fallthru
        _
      %p162 = scmp.le.s32.totalorder 1, %s15
      %p163 = scmp.lt.s32.totalorder %s15, 3
      %p164 = pnand %p162, %p163
      %p165 = pneg %p164
      // Predicated region
      $region25: #{tpu_custom_call.1} parent=5 // pred_check
        _
      $region26: #{tpu_custom_call.1} parent=5 // pred_check_branch
        %167 = sbr.rel (%p164) target = $region28
      $region27: #{tpu_custom_call.1} parent=5 // pred_region
        %s168 = ssub.s32 %s15, 1
        %s169 = sand.u32 %s42, 1
        %s170 = scalar_lea.sflag [#allocation3], %s169
        %s171 = sand.u32 %s42, 1
        %s172 = smul.addr %s171, 2
        %s173 = scalar_lea.vmem [#allocation2], %s172
        // Predicated region
        $region29: #{tpu_custom_call.1} parent=27 // pred_check
          %p174 = pneg %p55
        $region30: #{tpu_custom_call.1} parent=27 // pred_check_branch
          %176 = sbr.rel (%p174) target = $region32
        $region31: #{tpu_custom_call.1} parent=27 // pred_region
          %178 = dma.done %s170, 32
        $region32: #{tpu_custom_call.1} parent=27 // pred_fallthru
          _
        // Predicated region
        $region33: #{tpu_custom_call.1} parent=27 // pred_check
          %p179 = pneg %p81
        $region34: #{tpu_custom_call.1} parent=27 // pred_check_branch
          %181 = sbr.rel (%p179) target = $region36
        $region35: #{tpu_custom_call.1} parent=27 // pred_region
          %183 = dma.done [#allocation6], 32
        $region36: #{tpu_custom_call.1} parent=27 // pred_fallthru
          _
        %s184 = sand.u32 %s42, 1
        %s185 = scalar_lea.sflag [#allocation3], %s184
        %s186 = sand.u32 %s42, 1
        %s187 = smul.addr %s186, 2
        %s188 = scalar_lea.vmem [#allocation2], %s187
        %p189 = pneg %p55
        %p190 = pneg %p52
        %p191 = pneg %p81
        %p192 = pneg %p78
        %p193 = pneg %p109
        %p194 = pneg %p106
        %s195 = sand.u32 %s96, 1
        %s196 = scalar_lea.sflag [#allocation4], %s195
        %s197 = sand.u32 %s96, 1
        %s198 = smul.addr %s197, 2
        %s199 = scalar_lea.vmem [#allocation7], %s198
        %v200 = vld [vmem:[%s173] sm:$0x3]
        %v201 = vld [vmem:[#allocation5] sm:$0x3]
        %v202 = vadd.f32 %v200, %v201
        %203 = vst [vmem:[%s199] sm:$0x3] %v202
        %s204 = sand.u32 %s96, 1
        %s205 = scalar_lea.sflag [#allocation4], %s204
        %s206 = sand.u32 %s96, 1
        %s207 = smul.addr %s206, 2
        %s208 = scalar_lea.vmem [#allocation7], %s207
        // Predicated region
        $region37: #{tpu_custom_call.1} parent=27 // pred_check
          %p209 = pneg %p106
        $region38: #{tpu_custom_call.1} parent=27 // pred_check_branch
          %211 = sbr.rel (%p209) target = $region40
        $region39: #{tpu_custom_call.1} parent=27 // pred_region
          %213 = vsyncadd %s205, 0
          %s214 = sadd.s32 %s24, %s25
          %s215 = smul.addr %s214, 2
          %s216 = scalar_lea.hbm %s2, %s215
          %s218 = sshll.u32 %s208, 4
          %s219 = int_to_ptr.vmem [resolvable:$true] %s218
          %s220 = sshll.u32 %s216, 4
          %s221 = int_to_ptr.hbm [resolvable:$true] %s220
          %223 = dma.vmem_to_hbm [thread:$0]  %s219, 32, %s221, %s205
        $region40: #{tpu_custom_call.1} parent=27 // pred_fallthru
          _
      $region28: #{tpu_custom_call.1} parent=5 // pred_fallthru
        _
      %p224 = scmp.le.s32.totalorder 2, %s15
      // Predicated region
      $region41: #{tpu_custom_call.1} parent=5 // pred_check
        %p225 = pneg %p224
      $region42: #{tpu_custom_call.1} parent=5 // pred_check_branch
        %227 = sbr.rel (%p225) target = $region44
      $region43: #{tpu_custom_call.1} parent=5 // pred_region
        %s228 = ssub.s32 %s15, 2
        // Predicated region
        $region45: #{tpu_custom_call.1} parent=43 // pred_check
          %p229 = pneg %p112
        $region46: #{tpu_custom_call.1} parent=43 // pred_check_branch
          %231 = sbr.rel (%p229) target = $region48
        $region47: #{tpu_custom_call.1} parent=43 // pred_region
          %s232 = sand.u32 %s97, 1
          %s233 = scalar_lea.sflag [#allocation4], %s232
          %s234 = sand.u32 %s97, 1
          %s235 = smul.addr %s234, 2
          %s236 = scalar_lea.vmem [#allocation7], %s235
          %238 = dma.done %s233, 32
        $region48: #{tpu_custom_call.1} parent=43 // pred_fallthru
          _
      $region44: #{tpu_custom_call.1} parent=5 // pred_fallthru
        _
    $region6: #{tpu_custom_call.1} parent=1 // loop_footer
      %s19 = sadd.s32 1, %s15
    $region7: #{tpu_custom_call.1} parent=1 // loop_footer_branch
      %14 = sbr.rel target = $region3
    $region8: #{tpu_custom_call.1} parent=1 // loop_exit
      _
    %239 = vsyncpa [#allocation3], 1
    %s240 = scalar_lea.sflag [#allocation3], 1
    %241 = vsyncpa %s240, 1
    %242 = vsyncpa [#allocation6], 1
    %243 = vsyncpa [#allocation4], 1
    %s244 = scalar_lea.sflag [#allocation4], 1
    %245 = vsyncpa %s244, 1

// kernel: tpu_custom_call.1
$region0: #{tpu_custom_call.1}
  #allocation0 [shape = 'u32[]', space=smem, size = 0x4, offset = 0x4, fixed_abs, tag = 'smem constant byte address 0x4 - core index']
  #allocation1 [shape = 'u32[72,128]{1,0:T(1,128)}', space=vmem, size = 0x9000, scoped, tag = 'internal scratch']
  %s0 = inlined_call_operand.hbm [shape: f32[2,2,128], index: 0, kind: input, shape index: {}]
  %s1 = inlined_call_operand.hbm [shape: f32[2,128], index: 1, kind: input, shape index: {}]
  %s2 = inlined_call_operand.hbm [shape: f32[2,2,128], index: 2, kind: output, shape index: {}]
  %s3 = sld [smem:[#allocation0]]
  $region49: #{tpu_custom_call.1} parent=0
    _
  %s5 = ssub.s32 1, %s3
  %s6 = scalar_select 0, %s5, %s3
  $region1: #{tpu_custom_call.1} parent=0
    #allocation2 [shape = 'u8[2048]{0}', space=vmem, size = 0x800, scoped, tag = 'input window, operand 0']
    #allocation3 [shape = 's32[2]{0}', space=sflag, size = 0x8, scoped, tag = 'scoped memory for tpu_custom_call.1']
    #allocation4 [shape = 's32[2]{0}', space=sflag, size = 0x8, scoped, tag = 'scoped memory for tpu_custom_call.1']
    #allocation5 [shape = 'u8[1024]{0}', space=vmem, size = 0x400, scoped, tag = 'input window, operand 1, single buffered']
    #allocation6 [shape = 's32[1]{0}', space=sflag, size = 0x4, scoped, tag = 'scoped memory for tpu_custom_call.1']
    #allocation7 [shape = 'u8[2048]{0}', space=vmem, size = 0x800, scoped, tag = 'output window, operand 0']
    %7 = vsyncpa [#allocation3], 0
    %s8 = scalar_lea.sflag [#allocation3], 1
    %9 = vsyncpa %s8, 0
    %10 = vsyncpa [#allocation6], 0
    %11 = vsyncpa [#allocation4], 0
    %s12 = scalar_lea.sflag [#allocation4], 1
    %13 = vsyncpa %s12, 0
    loop: start=0, step=1, limit=4
    $region2: #{tpu_custom_call.1} parent=1 // loop_pre_header
      _
    $region3: #{tpu_custom_call.1} parent=1 // loop_header
      %s15 = sphi 0, %s19
      %p16 = scmp.ge.s32.totalorder %s15, 4
      %s22 = sphi 0, %s34
      %s23 = sphi 0, %s30
      %s24 = sphi 0, %s22
      %s25 = sphi 0, %s23
      %s26 = sphi 0, %s24
      %s27 = sphi 0, %s25
      %s39 = sphi 0, %s41
      %s42 = sphi 0, %s39
      %s43 = sphi 0, %s42
      %s59 = sphi 0, %s43
      %s65 = sphi 0, %s67
      %s68 = sphi 0, %s65
      %s69 = sphi 0, %s68
      %s85 = sphi 0, %s69
      %s93 = sphi 0, %s95
      %s96 = sphi 0, %s93
      %s97 = sphi 0, %s96
      %s113 = sphi 0, %s97
    $region4: #{tpu_custom_call.1} parent=1 // loop_header_branch
      %18 = sbr.rel (%p16) target = $region8
    $region5: #{tpu_custom_call.1} parent=1 // loop_body
      %s20 = ssub.s32 %s15, 1
      %s21 = ssub.s32 %s15, 2
      %s28 = sadd.s32 1, %s23
      %p29 = scmp.ge.s32.totalorder %s28, 2
      %s30 = scalar_select %p29, 0, %s28
      %s31 = sadd.s32 1, %s22
      %s32 = scalar_select %p29, %s31, %s22
      %p33 = scmp.ge.s32.totalorder %s32, 1
      %s34 = scalar_select %p33, 0, %s32
      %s35 = ssub.s32 %s23, %s30
      %s36 = ssub.s32 %s22, %s34
      %s37 = sor.u32 %s35, %s36
      %p38 = scmp.eq.s32.totalorder %s37, 0
      %s40 = sadd.s32 %s39, 1
      %s41 = scalar_select %p38, %s39, %s40
      %p44 = pneg %p38
      %p45 = scmp.eq.s32.totalorder %s15, 1
      %p46 = por %p44, %p45
      %p47 = scmp.ne.s32.totalorder %s39, %s42
      %p48 = scmp.eq.s32.totalorder %s15, 0
      %p49 = por %p47, %p48
      %p50 = scmp.ne.s32.totalorder %s39, %s42
      %p51 = scmp.eq.s32.totalorder %s20, 1
      %p52 = por %p50, %p51
      %p53 = scmp.ne.s32.totalorder %s42, %s43
      %p54 = scmp.eq.s32.totalorder %s20, 0
      %p55 = por %p53, %p54
      %p56 = scmp.ne.s32.totalorder %s42, %s43
      %p57 = scmp.eq.s32.totalorder %s21, 1
      %p58 = por %p56, %p57
      %p60 = scmp.ne.s32.totalorder %s43, %s59
      %p61 = scmp.eq.s32.totalorder %s21, 0
      %p62 = por %p60, %p61
      %s63 = ssub.s32 %s22, %s34
      %p64 = scmp.eq.s32.totalorder %s63, 0
      %s66 = sadd.s32 %s65, 1
      %s67 = scalar_select %p64, %s65, %s66
      %p70 = pneg %p64
      %p71 = scmp.eq.s32.totalorder %s15, 1
      %p72 = por %p70, %p71
      %p73 = scmp.ne.s32.totalorder %s65, %s68
      %p74 = scmp.eq.s32.totalorder %s15, 0
      %p75 = por %p73, %p74
      %p76 = scmp.ne.s32.totalorder %s65, %s68
      %p77 = scmp.eq.s32.totalorder %s20, 1
      %p78 = por %p76, %p77
      %p79 = scmp.ne.s32.totalorder %s68, %s69
      %p80 = scmp.eq.s32.totalorder %s20, 0
      %p81 = por %p79, %p80
      %p82 = scmp.ne.s32.totalorder %s68, %s69
      %p83 = scmp.eq.s32.totalorder %s21, 1
      %p84 = por %p82, %p83
      %p86 = scmp.ne.s32.totalorder %s69, %s85
      %p87 = scmp.eq.s32.totalorder %s21, 0
      %p88 = por %p86, %p87
      %s89 = ssub.s32 %s23, %s30
      %s90 = ssub.s32 %s22, %s34
      %s91 = sor.u32 %s89, %s90
      %p92 = scmp.eq.s32.totalorder %s91, 0
      %s94 = sadd.s32 %s93, 1
      %s95 = scalar_select %p92, %s93, %s94
      %p98 = pneg %p92
      %p99 = scmp.eq.s32.totalorder %s15, 1
      %p100 = por %p98, %p99
      %p101 = scmp.ne.s32.totalorder %s93, %s96
      %p102 = scmp.eq.s32.totalorder %s15, 0
      %p103 = por %p101, %p102
      %p104 = scmp.ne.s32.totalorder %s93, %s96
      %p105 = scmp.eq.s32.totalorder %s20, 1
      %p106 = por %p104, %p105
      %p107 = scmp.ne.s32.totalorder %s96, %s97
      %p108 = scmp.eq.s32.totalorder %s20, 0
      %p109 = por %p107, %p108
      %p110 = scmp.ne.s32.totalorder %s96, %s97
      %p111 = scmp.eq.s32.totalorder %s21, 1
      %p112 = por %p110, %p111
      %p114 = scmp.ne.s32.totalorder %s97, %s113
      %p115 = scmp.eq.s32.totalorder %s21, 0
      %p116 = por %p114, %p115
      %p117 = scmp.le.s32.totalorder 1, %s15
      %p118 = scmp.lt.s32.totalorder %s15, 3
      %p119 = pnand %p117, %p118
      %p120 = pneg %p119
      // Predicated region
      $region9: #{tpu_custom_call.1} parent=5 // pred_check
        _
      $region10: #{tpu_custom_call.1} parent=5 // pred_check_branch
        %122 = sbr.rel (%p119) target = $region12
      $region11: #{tpu_custom_call.1} parent=5 // pred_region
        %s123 = ssub.s32 %s15, 1
        // Predicated region
        $region13: #{tpu_custom_call.1} parent=11 // pred_check
          %p124 = pneg %p81
        $region14: #{tpu_custom_call.1} parent=11 // pred_check_branch
          %126 = sbr.rel (%p124) target = $region16
        $region15: #{tpu_custom_call.1} parent=11 // pred_region
          %128 = vsyncadd [#allocation6], 0
          %s129 = smul.addr %s24, 2
          %s130 = scalar_lea.hbm %s1, %s129
          %s132 = sshll.u32 %s130, 4
          %s133 = int_to_ptr.hbm [resolvable:$true] %s132
          %s134 = sshll.u32 [#allocation5], 4
          %s135 = int_to_ptr.vmem [resolvable:$true] %s134
          %137 = dma.hbm_to_vmem [thread:$0]  %s133, 32, %s135, [#allocation6]
        $region16: #{tpu_custom_call.1} parent=11 // pred_fallthru
          _
      $region12: #{tpu_custom_call.1} parent=5 // pred_fallthru
        _
      %p138 = scmp.lt.s32.totalorder %s15, 2
      // Predicated region
      $region17: #{tpu_custom_call.1} parent=5 // pred_check
        %p139 = pneg %p138
      $region18: #{tpu_custom_call.1} parent=5 // pred_check_branch
        %141 = sbr.rel (%p139) target = $region20
      $region19: #{tpu_custom_call.1} parent=5 // pred_region
        // Predicated region
        $region21: #{tpu_custom_call.1} parent=19 // pred_check
          %p142 = pneg %p49
        $region22: #{tpu_custom_call.1} parent=19 // pred_check_branch
          %144 = sbr.rel (%p142) target = $region24
        $region23: #{tpu_custom_call.1} parent=19 // pred_region
          %s145 = sand.u32 %s39, 1
          %s146 = scalar_lea.sflag [#allocation3], %s145
          %s147 = sand.u32 %s39, 1
          %s148 = smul.addr %s147, 2
          %s149 = scalar_lea.vmem [#allocation2], %s148
          %151 = vsyncadd %s146, 0
          %s152 = sadd.s32 %s22, %s23
          %s153 = smul.addr %s152, 2
          %s154 = scalar_lea.hbm %s0, %s153
          %s156 = sshll.u32 %s154, 4
          %s157 = int_to_ptr.hbm [resolvable:$true] %s156
          %s158 = sshll.u32 %s149, 4
          %s159 = int_to_ptr.vmem [resolvable:$true] %s158
          %161 = dma.hbm_to_vmem [thread:$0]  %s157, 32, %s159, %s146
        $region24: #{tpu_custom_call.1} parent=19 // pred_fallthru
          _
      $region20: #{tpu_custom_call.1} parent=5 // pred_fallthru
        _
      %p162 = scmp.le.s32.totalorder 1, %s15
      %p163 = scmp.lt.s32.totalorder %s15, 3
      %p164 = pnand %p162, %p163
      %p165 = pneg %p164
      // Predicated region
      $region25: #{tpu_custom_call.1} parent=5 // pred_check
        _
      $region26: #{tpu_custom_call.1} parent=5 // pred_check_branch
        %167 = sbr.rel (%p164) target = $region28
      $region27: #{tpu_custom_call.1} parent=5 // pred_region
        %s168 = ssub.s32 %s15, 1
        %s169 = sand.u32 %s42, 1
        %s170 = scalar_lea.sflag [#allocation3], %s169
        %s171 = sand.u32 %s42, 1
        %s172 = smul.addr %s171, 2
        %s173 = scalar_lea.vmem [#allocation2], %s172
        // Predicated region
        $region29: #{tpu_custom_call.1} parent=27 // pred_check
          %p174 = pneg %p55
        $region30: #{tpu_custom_call.1} parent=27 // pred_check_branch
          %176 = sbr.rel (%p174) target = $region32
        $region31: #{tpu_custom_call.1} parent=27 // pred_region
          %178 = dma.done %s170, 32
        $region32: #{tpu_custom_call.1} parent=27 // pred_fallthru
          _
        // Predicated region
        $region33: #{tpu_custom_call.1} parent=27 // pred_check
          %p179 = pneg %p81
        $region34: #{tpu_custom_call.1} parent=27 // pred_check_branch
          %181 = sbr.rel (%p179) target = $region36
        $region35: #{tpu_custom_call.1} parent=27 // pred_region
          %183 = dma.done [#allocation6], 32
        $region36: #{tpu_custom_call.1} parent=27 // pred_fallthru
          _
        %s184 = sand.u32 %s42, 1
        %s185 = scalar_lea.sflag [#allocation3], %s184
        %s186 = sand.u32 %s42, 1
        %s187 = smul.addr %s186, 2
        %s188 = scalar_lea.vmem [#allocation2], %s187
        %p189 = pneg %p55
        %p190 = pneg %p52
        %p191 = pneg %p81
        %p192 = pneg %p78
        %p193 = pneg %p109
        %p194 = pneg %p106
        %s195 = sand.u32 %s96, 1
        %s196 = scalar_lea.sflag [#allocation4], %s195
        %s197 = sand.u32 %s96, 1
        %s198 = smul.addr %s197, 2
        %s199 = scalar_lea.vmem [#allocation7], %s198
        %v200 = vld [vmem:[%s173] sm:$0x3]
        %v201 = vld [vmem:[#allocation5] sm:$0x3]
        %v202 = vadd.f32 %v200, %v201
        %203 = vst [vmem:[%s199] sm:$0x3] %v202
        %s204 = sand.u32 %s96, 1
        %s205 = scalar_lea.sflag [#allocation4], %s204
        %s206 = sand.u32 %s96, 1
        %s207 = smul.addr %s206, 2
        %s208 = scalar_lea.vmem [#allocation7], %s207
        // Predicated region
        $region37: #{tpu_custom_call.1} parent=27 // pred_check
          %p209 = pneg %p106
        $region38: #{tpu_custom_call.1} parent=27 // pred_check_branch
          %211 = sbr.rel (%p209) target = $region40
        $region39: #{tpu_custom_call.1} parent=27 // pred_region
          %213 = vsyncadd %s205, 0
          %s214 = sadd.s32 %s24, %s25
          %s215 = smul.addr %s214, 2
          %s216 = scalar_lea.hbm %s2, %s215
          %s218 = sshll.u32 %s208, 4
          %s219 = int_to_ptr.vmem [resolvable:$true] %s218
          %s220 = sshll.u32 %s216, 4
          %s221 = int_to_ptr.hbm [resolvable:$true] %s220
          %223 = dma.vmem_to_hbm [thread:$0]  %s219, 32, %s221, %s205
        $region40: #{tpu_custom_call.1} parent=27 // pred_fallthru
          _
      $region28: #{tpu_custom_call.1} parent=5 // pred_fallthru
        _
      %p224 = scmp.le.s32.totalorder 2, %s15
      // Predicated region
      $region41: #{tpu_custom_call.1} parent=5 // pred_check
        %p225 = pneg %p224
      $region42: #{tpu_custom_call.1} parent=5 // pred_check_branch
        %227 = sbr.rel (%p225) target = $region44
      $region43: #{tpu_custom_call.1} parent=5 // pred_region
        %s228 = ssub.s32 %s15, 2
        // Predicated region
        $region45: #{tpu_custom_call.1} parent=43 // pred_check
          %p229 = pneg %p112
        $region46: #{tpu_custom_call.1} parent=43 // pred_check_branch
          %231 = sbr.rel (%p229) target = $region48
        $region47: #{tpu_custom_call.1} parent=43 // pred_region
          %s232 = sand.u32 %s97, 1
          %s233 = scalar_lea.sflag [#allocation4], %s232
          %s234 = sand.u32 %s97, 1
          %s235 = smul.addr %s234, 2
          %s236 = scalar_lea.vmem [#allocation7], %s235
          %238 = dma.done %s233, 32
        $region48: #{tpu_custom_call.1} parent=43 // pred_fallthru
          _
      $region44: #{tpu_custom_call.1} parent=5 // pred_fallthru
        _
    $region6: #{tpu_custom_call.1} parent=1 // loop_footer
      %s19 = sadd.s32 1, %s15
    $region7: #{tpu_custom_call.1} parent=1 // loop_footer_branch
      %14 = sbr.rel target = $region3
    $region8: #{tpu_custom_call.1} parent=1 // loop_exit
      _
    %239 = vsyncpa [#allocation3], 1
    %s240 = scalar_lea.sflag [#allocation3], 1
    %241 = vsyncpa %s240, 1
    %242 = vsyncpa [#allocation6], 1
    %243 = vsyncpa [#allocation4], 1
    %s244 = scalar_lea.sflag [#allocation4], 1
    %245 = vsyncpa %s244, 1

</llo_original>
